<compile_context>
chip_gen: v6e
topology: v6e:2x2x1
jax: 0.10.0
libtpu: 0.0.40
codegen_flags: <defaults>
</compile_context>

<pallas_src>
import jax
import jax.numpy as jnp
import numpy as np
from jax.experimental import pallas as pl
from jax.experimental.pallas import tpu as pltpu


# ---------------------------------------------------------------------------
# Tiled segment-mean kernel with fused conditioning add.
#   grid = (num_d_tiles, num_n_chunks)   -- reduction (N) axis LAST
#   batch_ref : [1, Nc]  int32, graph id per node in this chunk (-1 = padding)
#   x_ref     : [Nc, Dt] node-feature tile (x.dtype)
#   c_ref     : [B, Dt]  f32 conditioning tile (already projected in wrapper)
#   invcnt_ref: [B, 1]   f32, 1 / max(node_count, 1) per graph
#   o_ref     : [B, Dt]  output tile (resident across the reduction axis)
#   acc_ref   : [B, Dt]  f32 VMEM accumulator (scratch)
# ---------------------------------------------------------------------------
def _mean_aggr_kernel(batch_ref, x_ref, c_ref, invcnt_ref, o_ref, acc_ref):
    k = pl.program_id(1)

    @pl.when(k == 0)
    def _():
        acc_ref[...] = jnp.zeros_like(acc_ref)

    B = acc_ref.shape[0]
    Nc = x_ref.shape[0]
    # Per-chunk one-hot assignment, built in x.dtype (0/1 exact even in bf16);
    # f32 accumulation happens inside the MXU via preferred_element_type.
    # NOTE: for very large B, a scalar-prefetched per-graph-offset + contiguous
    # VPU segment-sum would avoid the [B, Nc] mask entirely; for typical B the
    # kernel stays HBM-bandwidth-bound either way (x is read exactly once).
    graph_ids = jax.lax.broadcasted_iota(jnp.int32, (B, Nc), 0)        # [B, Nc]
    onehot = (batch_ref[...] == graph_ids).astype(x_ref.dtype)         # [B, Nc]
    acc_ref[...] += jnp.dot(onehot, x_ref[...],
                            preferred_element_type=jnp.float32)        # [B, Dt]

    @pl.when(k == pl.num_programs(1) - 1)
    def _():
        o_ref[...] = (acc_ref[...] * invcnt_ref[...]
                      + c_ref[...]).astype(o_ref.dtype)


def _round_up(a, m):
    return (a + m - 1) // m * m


def mean_aggr_forward(x, batch, num_graphs, y=None, W=None, bias=None,
                      *, n_chunk=1024, d_tile_max=512):
    """Pallas implementation of MeanAggr.forward.

    x     : [N, D]  node features
    batch : [N]     int32 sorted graph ids in [0, num_graphs)
    y     : [B, Dy] optional per-graph conditioning
    W     : [Dy, D] lin_c weight (stored transposed vs. torch's [D, Dy])
    bias  : [D]     lin_c bias
    returns [B, D]
    """
    N, D = x.shape
    B = num_graphs

    # Conditioning c = y @ W + b: tiny matmul, plain XLA in the wrapper; its add
    # is fused into the kernel's finalize step.
    if y is not None:
        c = (y.astype(jnp.float32) @ W.astype(jnp.float32)
             + bias.astype(jnp.float32).reshape(1, D))
    else:
        c = jnp.zeros((B, D), jnp.float32)

    # Per-graph inverse counts (empty graphs -> mean 0 via the max(.,1) guard).
    counts = jnp.zeros((B,), jnp.float32).at[batch].add(1.0)
    inv_counts = (1.0 / jnp.maximum(counts, 1.0)).reshape(B, 1)

    # --- tile plan -----------------------------------------------------------
    nc = min(n_chunk, _round_up(N, 128))          # node chunk, multiple of 128
    Np = _round_up(N, nc)
    num_n = Np // nc

    if D % 128 == 0 and D > d_tile_max:
        dt = 128
        for cand in (512, 256, 128):
            if cand <= d_tile_max and D % cand == 0:
                dt = cand
                break
    else:
        dt = D                                     # full-D block (always legal)
    num_d = D // dt

    # Pad the node axis; padded rows get graph id -1 so they contribute nothing.
    if Np != N:
        x = jnp.pad(x, ((0, Np - N), (0, 0)))
        batch = jnp.pad(batch.astype(jnp.int32), (0, Np - N),
                        constant_values=-1)
    batch_2d = batch.reshape(1, Np).astype(jnp.int32)

    out = pl.pallas_call(
        _mean_aggr_kernel,
        out_shape=jax.ShapeDtypeStruct((B, D), x.dtype),
        grid_spec=pltpu.PrefetchScalarGridSpec(
            num_scalar_prefetch=0,
            grid=(num_d, num_n),
            in_specs=[
                pl.BlockSpec((1, nc),  lambda d, k: (0, k)),   # batch chunk
                pl.BlockSpec((nc, dt), lambda d, k: (k, d)),   # x tile
                pl.BlockSpec((B, dt),  lambda d, k: (0, d)),   # conditioning
                pl.BlockSpec((B, 1),   lambda d, k: (0, 0)),   # 1/counts
            ],
            out_specs=pl.BlockSpec((B, dt), lambda d, k: (0, d)),
            scratch_shapes=[pltpu.VMEM((B, dt), jnp.float32)],
        ),
        compiler_params=pltpu.CompilerParams(
            dimension_semantics=("parallel", "arbitrary"),
            vmem_limit_bytes=32 * 1024 * 1024,
        ),
    )(batch_2d, x, c, inv_counts)
    return out


if __name__ == "__main__":
    key = jax.random.PRNGKey(0)
    k_x, k_y, k_w, k_b, k_x2 = jax.random.split(key, 5)

    # ---- Case 1: small shapes matching the module (B=2, D=32, Dy=8, N=16) ----
    N, B, D, Dy = 16, 2, 32, 8
    x = jax.random.normal(k_x, (N, D), dtype=jnp.float32)
    y = jax.random.normal(k_y, (B, Dy), dtype=jnp.float32)
    batch = jnp.array([0] * 9 + [1] * 7, dtype=jnp.int32)   # sorted, as PyG assumes
    W = jax.random.normal(k_w, (Dy, D), dtype=jnp.float32) * 0.1  # stored as [Dy, D]
    bias = jax.random.normal(k_b, (D,), dtype=jnp.float32) * 0.1

    out = jax.block_until_ready(mean_aggr_forward(x, batch, B, y=y, W=W, bias=bias))

    c_ref = y @ W + bias
    seg_sum = jax.ops.segment_sum(x, batch, num_segments=B)
    cnt = jax.ops.segment_sum(jnp.ones((N, 1), jnp.float32), batch, num_segments=B)
    ref = seg_sum / cnt + c_ref
    np.testing.assert_allclose(np.asarray(out), np.asarray(ref), rtol=1e-5, atol=1e-5)

    # y=None path (plain mean pooling).
    out_no_y = jax.block_until_ready(mean_aggr_forward(x, batch, B))
    np.testing.assert_allclose(np.asarray(out_no_y), np.asarray(seg_sum / cnt),
                               rtol=1e-5, atol=1e-5)

    # ---- Case 2: exercises multi-chunk N reduction and D tiling (grid (5, 2)) ----
    N2, B2, D2 = 200, 4, 640
    x2 = jax.random.normal(k_x2, (N2, D2), dtype=jnp.float32)
    sizes = np.array([70, 50, 60, 20])
    batch2 = jnp.asarray(np.repeat(np.arange(B2), sizes), dtype=jnp.int32)
    out2 = jax.block_until_ready(mean_aggr_forward(x2, batch2, B2, n_chunk=128))
    seg2 = jax.ops.segment_sum(x2, batch2, num_segments=B2)
    cnt2 = jax.ops.segment_sum(jnp.ones((N2, 1), jnp.float32), batch2, num_segments=B2)
    np.testing.assert_allclose(np.asarray(out2), np.asarray(seg2 / cnt2),
                               rtol=1e-5, atol=1e-5)

    print("KERNEL_OK")
</pallas_src>

<mosaic_0001>
module attributes {stable_mosaic.version = 11 : i64} {
  func.func @_mean_aggr_kernel(%arg0: i32, %arg1: i32, %arg2: memref<1x128xi32, #tpu.memory_space<vmem>>, %arg3: memref<128x32xf32, #tpu.memory_space<vmem>>, %arg4: memref<2x32xf32, #tpu.memory_space<vmem>>, %arg5: memref<2x1xf32, #tpu.memory_space<vmem>>, %arg6: memref<2x32xf32, #tpu.memory_space<vmem>>, %arg7: memref<2x32xf32, #tpu.memory_space<vmem>>) attributes {dimension_semantics = [#tpu.dimension_semantics<parallel>, #tpu.dimension_semantics<arbitrary>], iteration_bounds = array<i64: 1, 1>, scalar_prefetch = 0 : i64, scratch_operands = 1 : i64, tpu.core_type = #tpu.core_type<tc>, window_params = [{transform_indices = @transform_0, window_bounds = array<i64: 1, 128>}, {transform_indices = @transform_1, window_bounds = array<i64: 128, 32>}, {transform_indices = @transform_2, window_bounds = array<i64: 2, 32>}, {pipeline_mode = #tpu.pipeline_mode<synchronous>, transform_indices = @transform_3, window_bounds = array<i64: 2, 1>}, {transform_indices = @transform_4, window_bounds = array<i64: 2, 32>}]} {
    %c0_i32 = arith.constant 0 : i32
    %0 = arith.cmpi eq, %arg1, %c0_i32 : i32
    %1 = arith.extui %0 : i1 to i32
    %c0_i32_0 = arith.constant 0 : i32
    %2 = arith.cmpi ne, %1, %c0_i32_0 : i32
    scf.if %2 {
      %cst_10 = arith.constant 0.000000e+00 : f32
      %17 = vector.broadcast %cst_10 : f32 to vector<2x32xf32>
      %c0_11 = arith.constant 0 : index
      %c0_12 = arith.constant 0 : index
      %18 = vector.load %arg7[%c0_11, %c0_12] : memref<2x32xf32, #tpu.memory_space<vmem>>, vector<2x32xf32>
      tpu.vector_store %arg7[%c0_11, %c0_12], %17 {strides = array<i32>} : memref<2x32xf32, #tpu.memory_space<vmem>>, vector<2x32xf32>,
    } else {
    }
    %3 = tpu.iota {dimensions = array<i32: 0>} : vector<2x128xi32>
    %c0 = arith.constant 0 : index
    %c0_1 = arith.constant 0 : index
    %4 = vector.load %arg2[%c0, %c0_1] : memref<1x128xi32, #tpu.memory_space<vmem>>, vector<1x128xi32>
    %5 = vector.broadcast %4 : vector<1x128xi32> to vector<2x128xi32>
    %6 = arith.cmpi eq, %5, %3 : vector<2x128xi32>
    %7 = arith.extui %6 : vector<2x128xi1> to vector<2x128xi32>
    %8 = arith.sitofp %7 : vector<2x128xi32> to vector<2x128xf32>
    %c0_2 = arith.constant 0 : index
    %c0_3 = arith.constant 0 : index
    %9 = vector.load %arg7[%c0_2, %c0_3] : memref<2x32xf32, #tpu.memory_space<vmem>>, vector<2x32xf32>
    %c0_4 = arith.constant 0 : index
    %c0_5 = arith.constant 0 : index
    %10 = vector.load %arg3[%c0_4, %c0_5] : memref<128x32xf32, #tpu.memory_space<vmem>>, vector<128x32xf32>
    %cst = arith.constant dense<0.000000e+00> : vector<2x32xf32>
    %11 = tpu.matmul %8, %10, %cst {dimension_numbers = #tpu.dot_dimension_numbers<[1], [0], [0], [1], [0, 0, 1, 1], [], []>} : vector<2x128xf32>, vector<128x32xf32>, vector<2x32xf32> -> vector<2x32xf32>
    %12 = arith.addf %9, %11 : vector<2x32xf32>
    %c0_6 = arith.constant 0 : index
    %c0_7 = arith.constant 0 : index
    %13 = vector.load %arg7[%c0_6, %c0_7] : memref<2x32xf32, #tpu.memory_space<vmem>>, vector<2x32xf32>
    tpu.vector_store %arg7[%c0_6, %c0_7], %12 {strides = array<i32>} : memref<2x32xf32, #tpu.memory_space<vmem>>, vector<2x32xf32>,
    %c0_i32_8 = arith.constant 0 : i32
    %14 = arith.cmpi eq, %arg1, %c0_i32_8 : i32
    %15 = arith.extui %14 : i1 to i32
    %c0_i32_9 = arith.constant 0 : i32
    %16 = arith.cmpi ne, %15, %c0_i32_9 : i32
    scf.if %16 {
      %c0_10 = arith.constant 0 : index
      %c0_11 = arith.constant 0 : index
      %17 = vector.load %arg7[%c0_10, %c0_11] : memref<2x32xf32, #tpu.memory_space<vmem>>, vector<2x32xf32>
      %c0_12 = arith.constant 0 : index
      %c0_13 = arith.constant 0 : index
      %18 = vector.load %arg5[%c0_12, %c0_13] : memref<2x1xf32, #tpu.memory_space<vmem>>, vector<2x1xf32>
      %19 = vector.broadcast %18 : vector<2x1xf32> to vector<2x32xf32>
      %20 = arith.mulf %17, %19 : vector<2x32xf32>
      %c0_14 = arith.constant 0 : index
      %c0_15 = arith.constant 0 : index
      %21 = vector.load %arg4[%c0_14, %c0_15] : memref<2x32xf32, #tpu.memory_space<vmem>>, vector<2x32xf32>
      %22 = arith.addf %20, %21 : vector<2x32xf32>
      %c0_16 = arith.constant 0 : index
      %c0_17 = arith.constant 0 : index
      %23 = vector.load %arg6[%c0_16, %c0_17] : memref<2x32xf32, #tpu.memory_space<vmem>>, vector<2x32xf32>
      tpu.vector_store %arg6[%c0_16, %c0_17], %22 {strides = array<i32>} : memref<2x32xf32, #tpu.memory_space<vmem>>, vector<2x32xf32>,
    } else {
    }
    return
  }
  func.func @transform_0(%arg0: i32, %arg1: i32) -> (i32, i32) {
    %c0_i32 = arith.constant 0 : i32
    %c0_i32_0 = arith.constant 0 : i32
    return %c0_i32, %arg1 : i32, i32
  }
  func.func @transform_1(%arg0: i32, %arg1: i32) -> (i32, i32) {
    %c0_i32 = arith.constant 0 : i32
    return %arg1, %arg0 : i32, i32
  }
  func.func @transform_2(%arg0: i32, %arg1: i32) -> (i32, i32) {
    %c0_i32 = arith.constant 0 : i32
    %c0_i32_0 = arith.constant 0 : i32
    return %c0_i32, %arg0 : i32, i32
  }
  func.func @transform_3(%arg0: i32, %arg1: i32) -> (i32, i32) {
    %c0_i32 = arith.constant 0 : i32
    %c0_i32_0 = arith.constant 0 : i32
    %c0_i32_1 = arith.constant 0 : i32
    return %c0_i32, %c0_i32_0 : i32, i32
  }
  func.func @transform_4(%arg0: i32, %arg1: i32) -> (i32, i32) {
    %c0_i32 = arith.constant 0 : i32
    %c0_i32_0 = arith.constant 0 : i32
    return %c0_i32, %arg0 : i32, i32
  }
}

</mosaic_0001>

<llo_original>
// kernel: tpu_custom_call.1
$region0: #{tpu_custom_call.1}
  #allocation0 [shape = 'u32[]', space=smem, size = 0x4, offset = 0x4, fixed_abs, tag = 'smem constant byte address 0x4 - core index']
  #allocation1 [shape = 'u32[144,128]{1,0:T(1,128)}', space=vmem, size = 0x12000, scoped, tag = 'internal scratch']
  #allocation2 [shape = 'f32[2,32]{1,0:T(2,128)}', space=vmem, size = 0x400, scoped, tag = 'scratch operand']
  %s0 = inlined_call_operand.vmem [shape: s32[1,128], index: 0, kind: input, shape index: {}]
  %s1 = inlined_call_operand.vmem [shape: f32[128,32], index: 1, kind: input, shape index: {}]
  %s2 = inlined_call_operand.vmem [shape: f32[2,32], index: 2, kind: input, shape index: {}]
  %s3 = inlined_call_operand.vmem [shape: f32[2,1], index: 3, kind: input, shape index: {}]
  %s4 = inlined_call_operand.hbm [shape: f32[2,32], index: 4, kind: output, shape index: {}]
  %s5 = sld [smem:[#allocation0]]
  $region34: #{tpu_custom_call.1} parent=0
    _
  %s7 = ssub.s32 1, %s5
  %s8 = scalar_select 0, %s7, %s5
  $region1: #{tpu_custom_call.1} parent=0
    #allocation3 [shape = 'u8[1024]{0}', space=vmem, size = 0x400, scoped, tag = 'output window, operand 0, single buffered']
    #allocation4 [shape = 's32[1]{0}', space=sflag, size = 0x4, scoped, tag = 'scoped memory for tpu_custom_call.1']
    %9 = vsyncpa [#allocation4], 0
    // Predicated region
    $region2: #{tpu_custom_call.1} parent=1 // pred_check
      _
    $region3: #{tpu_custom_call.1} parent=1 // pred_check_branch
      %11 = sbr.rel (0) target = $region5
    $region4: #{tpu_custom_call.1} parent=1 // pred_region
      _
    $region5: #{tpu_custom_call.1} parent=1 // pred_fallthru
      _
    // Predicated region
    $region6: #{tpu_custom_call.1} parent=1 // pred_check
      _
    $region7: #{tpu_custom_call.1} parent=1 // pred_check_branch
      %13 = sbr.rel (0) target = $region9
    $region8: #{tpu_custom_call.1} parent=1 // pred_region
      _
    $region9: #{tpu_custom_call.1} parent=1 // pred_fallthru
      _
    // Predicated region
    $region10: #{tpu_custom_call.1} parent=1 // pred_check
      _
    $region11: #{tpu_custom_call.1} parent=1 // pred_check_branch
      %15 = sbr.rel (0) target = $region13
    $region12: #{tpu_custom_call.1} parent=1 // pred_region
      _
    $region13: #{tpu_custom_call.1} parent=1 // pred_fallthru
      _
    // Predicated region
    $region14: #{tpu_custom_call.1} parent=1 // pred_check
      _
    $region15: #{tpu_custom_call.1} parent=1 // pred_check_branch
      %17 = sbr.rel (0) target = $region17
    $region16: #{tpu_custom_call.1} parent=1 // pred_region
      _
    $region17: #{tpu_custom_call.1} parent=1 // pred_fallthru
      _
    %p18 = scmp.eq.s32.totalorder 0, 0
    // Predicated region
    $region18: #{tpu_custom_call.1} parent=1 // pred_check
      %p19 = pneg %p18
    $region19: #{tpu_custom_call.1} parent=1 // pred_check_branch
      %21 = sbr.rel (%p19) target = $region21
    $region20: #{tpu_custom_call.1} parent=1 // pred_region
      %vm22 = vcmask 254976
      %23 = vst.msk [vmem:[#allocation2] sm:$0x3] %vm22, 0.0
    $region21: #{tpu_custom_call.1} parent=1 // pred_fallthru
      _
    %v24 = vlaneseq
    %v25 = vshrl.u32 %v24, 7
    %v26 = vld [vmem:[%s0] sm:$0x1]
    %v27 = vlaneseq
    %v28 = vshrl.u32 %v27, 7
    %v29 = vsub.s32 0, %v28
    %v30 = vrot.slane %v26, %v29
    %vm31 = vcmp.eq.s32.totalorder %v30, %v25
    %v32 = vsel %vm31, 1, 0
    %v33 = vcvt.s32.f32 %v32
    %v34 = vld [vmem:[#allocation2] sm:$0x3]
    %v35 = vld [vmem:[%s1] sm:$0xff]
    %v36 = vld [vmem:[%s1 + $0x8] sm:$0xff]
    %v37 = vld [vmem:[%s1 + $0x10] sm:$0xff]
    %v38 = vld [vmem:[%s1 + $0x18] sm:$0xff]
    %v39 = vld [vmem:[%s1 + $0x20] sm:$0xff]
    %v40 = vld [vmem:[%s1 + $0x28] sm:$0xff]
    %v41 = vld [vmem:[%s1 + $0x30] sm:$0xff]
    %v42 = vld [vmem:[%s1 + $0x38] sm:$0xff]
    %v43 = vld [vmem:[%s1 + $0x40] sm:$0xff]
    %v44 = vld [vmem:[%s1 + $0x48] sm:$0xff]
    %v45 = vld [vmem:[%s1 + $0x50] sm:$0xff]
    %v46 = vld [vmem:[%s1 + $0x58] sm:$0xff]
    %v47 = vld [vmem:[%s1 + $0x60] sm:$0xff]
    %v48 = vld [vmem:[%s1 + $0x68] sm:$0xff]
    %v49 = vld [vmem:[%s1 + $0x70] sm:$0xff]
    %v50 = vld [vmem:[%s1 + $0x78] sm:$0xff]
    %51 = vmatprep.subr.mxu0 0.0
    %52 = vmatpush1.msra.mxu0 %v50
    %53 = vmatprep.subr.mxu0 0.0
    %54 = vmatpush1.msra.mxu0 %v49
    %55 = vmatprep.subr.mxu0 0.0
    %56 = vmatpush1.msra.mxu0 %v48
    %57 = vmatprep.subr.mxu0 0.0
    %58 = vmatpush1.msra.mxu0 %v47
    %59 = vmatprep.subr.mxu0 0.0
    %60 = vmatpush1.msra.mxu0 %v46
    %61 = vmatprep.subr.mxu0 0.0
    %62 = vmatpush1.msra.mxu0 %v45
    %63 = vmatprep.subr.mxu0 0.0
    %64 = vmatpush1.msra.mxu0 %v44
    %65 = vmatprep.subr.mxu0 0.0
    %66 = vmatpush1.msra.mxu0 %v43
    %67 = vmatprep.subr.mxu0 0.0
    %68 = vmatpush1.msra.mxu0 %v42
    %69 = vmatprep.subr.mxu0 0.0
    %70 = vmatpush1.msra.mxu0 %v41
    %71 = vmatprep.subr.mxu0 0.0
    %72 = vmatpush1.msra.mxu0 %v40
    %73 = vmatprep.subr.mxu0 0.0
    %74 = vmatpush1.msra.mxu0 %v39
    %75 = vmatprep.subr.mxu0 0.0
    %76 = vmatpush1.msra.mxu0 %v38
    %77 = vmatprep.subr.mxu0 0.0
    %78 = vmatpush1.msra.mxu0 %v37
    %79 = vmatprep.subr.mxu0 0.0
    %80 = vmatpush1.msra.mxu0 %v36
    %81 = vmatprep.subr.mxu0 0.0
    %82 = vmatpush1.msra.mxu0 %v35
    %83 = vmatprep.subr.mxu0 0.0
    %84 = vmatpush2.msra.mxu0 0.0
    %85 = vmatprep.subr.mxu0 0.0
    %86 = vmatpush2.msra.mxu0 0.0
    %87 = vmatprep.subr.mxu0 0.0
    %88 = vmatpush2.msra.mxu0 0.0
    %89 = vmatprep.subr.mxu0 0.0
    %90 = vmatpush2.msra.mxu0 0.0
    %91 = vmatprep.subr.mxu0 0.0
    %92 = vmatpush2.msra.mxu0 0.0
    %93 = vmatprep.subr.mxu0 0.0
    %94 = vmatpush2.msra.mxu0 0.0
    %95 = vmatprep.subr.mxu0 0.0
    %96 = vmatpush2.msra.mxu0 0.0
    %97 = vmatprep.subr.mxu0 0.0
    %98 = vmatpush2.msra.mxu0 0.0
    %99 = vmatprep.subr.mxu0 0.0
    %100 = vmatpush2.msra.mxu0 0.0
    %101 = vmatprep.subr.mxu0 0.0
    %102 = vmatpush2.msra.mxu0 0.0
    %103 = vmatprep.subr.mxu0 0.0
    %104 = vmatpush2.msra.mxu0 0.0
    %105 = vmatprep.subr.mxu0 0.0
    %106 = vmatpush2.msra.mxu0 0.0
    %107 = vmatprep.subr.mxu0 0.0
    %108 = vmatpush2.msra.mxu0 0.0
    %109 = vmatprep.subr.mxu0 0.0
    %110 = vmatpush2.msra.mxu0 0.0
    %111 = vmatprep.subr.mxu0 0.0
    %112 = vmatpush2.msra.mxu0 0.0
    %113 = vmatprep.subr.mxu0 0.0
    %114 = vmatpush2.msra.mxu0 0.0
    %115 = vmatprep.mubr.f32.mxu0 0.0
    %116 = vmatmul.mubr.f32.gmra.mxu0 %v33
    %v117 = vpop.f32.mrf.mxu0
    %v118 = vadd.f32 0.0, %v117
    %v119 = vpop.f32.mrf.mxu0
    %120 = vdwg.mxu0
    %v121 = vadd.f32 %v34, %v118
    %vm122 = vcmask 254976
    %123 = vst.msk [vmem:[#allocation2] sm:$0x3] %vm122, %v121
    // Predicated region
    $region22: #{tpu_custom_call.1} parent=1 // pred_check
      %p124 = pneg %p18
    $region23: #{tpu_custom_call.1} parent=1 // pred_check_branch
      %126 = sbr.rel (%p124) target = $region25
    $region24: #{tpu_custom_call.1} parent=1 // pred_region
      %v127 = vld [vmem:[#allocation2] sm:$0x3]
      %v128 = vld [vmem:[%s3] sm:$0x3]
      %130 = vset.pattern.permute.xlu0 0
      %131 = vperm.xlu0 %130, %v128
      %v132 = vpop.permute.xlu0 %131
      %v134 = vmul.f32 %v127, %v132
      %v135 = vld [vmem:[%s2] sm:$0x3]
      %v136 = vadd.f32 %v134, %v135
      %137 = vst.msk [vmem:[#allocation3] sm:$0x3] %vm122, %v136
    $region25: #{tpu_custom_call.1} parent=1 // pred_fallthru
      _
    // Predicated region
    $region26: #{tpu_custom_call.1} parent=1 // pred_check
      _
    $region27: #{tpu_custom_call.1} parent=1 // pred_check_branch
      %139 = sbr.rel (0) target = $region29
    $region28: #{tpu_custom_call.1} parent=1 // pred_region
      %s141 = ssub.s32 32, 32
      %142 = vsyncadd [#allocation4], %s141
      %s144 = sshll.u32 [#allocation3], 4
      %s145 = int_to_ptr.vmem [resolvable:$true] %s144
      %147 = dma.vmem_to_hbm [thread:$0]  %s145, 32, %s4, [#allocation4]
    $region29: #{tpu_custom_call.1} parent=1 // pred_fallthru
      _
    // Predicated region
    $region30: #{tpu_custom_call.1} parent=1 // pred_check
      _
    $region31: #{tpu_custom_call.1} parent=1 // pred_check_branch
      %149 = sbr.rel (0) target = $region33
    $region32: #{tpu_custom_call.1} parent=1 // pred_region
      %150 = dma.done [#allocation4], 32
    $region33: #{tpu_custom_call.1} parent=1 // pred_fallthru
      _
    %151 = vsyncpa [#allocation4], 1

</llo_original>
